<compile_context>
chip_gen: v6e
topology: v6e:2x2x1
jax: 0.10.0
libtpu: 0.0.40
codegen_flags: <defaults>
</compile_context>

<pallas_src>
import jax
import jax.numpy as jnp
from jax.experimental import pallas as pl
from jax.experimental.pallas import tpu as pltpu


# ---------------------------------------------------------------------------
# Kernel body: fc1 -> bias -> ReLU -> fc2 -> bias, fused, f32 accumulation.
# ---------------------------------------------------------------------------
def _mlp_kernel(x_ref, w1_ref, b1_ref, w2_ref, b2_ref, o_ref):
    # fc1: x @ W1 (MXU, f32 accumulate); bias + ReLU stay in f32 on the VPU.
    h = jnp.dot(x_ref[...], w1_ref[...], preferred_element_type=jnp.float32)
    h = jnp.maximum(h + b1_ref[...], 0.0)          # b1 is (1, H) -> broadcasts
    # fc2: h @ W2 (cast h to the weight dtype: no-op for f32, bf16 on v6e/v7x).
    out = jnp.dot(h.astype(w2_ref.dtype), w2_ref[...],
                  preferred_element_type=jnp.float32)
    o_ref[...] = (out + b2_ref[...]).astype(o_ref.dtype)


# ---------------------------------------------------------------------------
# Small helpers.
# ---------------------------------------------------------------------------
def _round_up(x, m):
    return ((x + m - 1) // m) * m


def _cdiv(a, b):
    return (a + b - 1) // b


def _device_kind():
    try:
        return jax.devices()[0].device_kind.lower()
    except Exception:
        return ""


def _is_pre_v6():
    k = _device_kind()
    return any(t in k for t in ("v2", "v3", "v4", "v5"))


def default_param_dtype():
    # v6e/v7x: bf16 operands feed the 256x256 MXU at full rate and halve
    # HBM/DMA bytes + VMEM.  v5e and older: keep f32 (no VPU/EUP bf16 path;
    # the 128x128 MXU is already well fed).
    return jnp.float32 if _is_pre_v6() else jnp.bfloat16


def _round_lanes(n, *, prefer_256):
    r = _round_up(n, 128)
    if prefer_256 and r > 128:
        # v6e/v7x MXU is 256 wide; prefer 256-multiples once we are past 128.
        r = _round_up(r, 256)
    return r


def _choose_batch_tiling(batch, *, sublane, max_tile=256, min_tiles=2):
    """Pick (tile_m, padded_M, grid_m).

    Targets >= `min_tiles` tiles when batch allows (so the "parallel" batch
    axis has work for both v7x TensorCores; a serial 2-step loop on v5e/v6e is
    harmless), caps tiles at `max_tile`, and bounds padding waste to < 1 tile
    by deriving tile_m from cdiv(batch, n_tiles).
    """
    n_tiles = max(_cdiv(batch, max_tile), min_tiles)
    tile_m = _round_up(_cdiv(batch, n_tiles), sublane)
    tile_m = min(tile_m, _round_up(batch, sublane))
    m_padded = _round_up(batch, tile_m)
    return tile_m, m_padded, m_padded // tile_m


# ---------------------------------------------------------------------------
# One-time (init) parameter preparation: pad + cast ONCE, not per forward.
# ---------------------------------------------------------------------------
def prepare_params(w1, b1, w2, b2, *, param_dtype=None):
    """Pad weights/biases to lane-friendly shapes and cast — call once at init.

    w1: [in, hidden], b1: [1, hidden], w2: [hidden, out], b2: [1, out].
    Zero padding is exact for fc1 -> ReLU -> fc2 (relu(0)=0; zero W2 rows/cols
    contribute nothing).  Biases stay f32 (added after the f32 accumulate).
    """
    if param_dtype is None:
        param_dtype = default_param_dtype()
    prefer_256 = not _is_pre_v6()

    in_size, hidden = w1.shape
    out_size = w2.shape[1]
    H = _round_lanes(hidden, prefer_256=prefer_256)
    N = _round_lanes(out_size, prefer_256=prefer_256)

    w1p = jnp.zeros((in_size, H), param_dtype).at[:, :hidden].set(
        w1.astype(param_dtype))
    b1p = jnp.zeros((1, H), jnp.float32).at[:, :hidden].set(
        b1.astype(jnp.float32))
    w2p = jnp.zeros((H, N), param_dtype).at[:hidden, :out_size].set(
        w2.astype(param_dtype))
    b2p = jnp.zeros((1, N), jnp.float32).at[:, :out_size].set(
        b2.astype(jnp.float32))
    return w1p, b1p, w2p, b2p


# ---------------------------------------------------------------------------
# Forward wrapper.
# ---------------------------------------------------------------------------
def simple_model_forward(x, w1p, b1p, w2p, b2p, *, out_size, max_batch_tile=256):
    """Fused fc1 -> ReLU -> fc2.  Params must come from `prepare_params`.

    x: [batch, in_size]; returns [batch, out_size] in float32.
    """
    batch, in_size = x.shape
    H = w1p.shape[1]
    N = w2p.shape[1]
    param_dtype = w1p.dtype
    itemsize = param_dtype.itemsize
    sublane = 16 if itemsize == 2 else 8   # bf16 packs 2 rows per sublane

    tile_m, M, grid_m = _choose_batch_tiling(
        batch, sublane=sublane, max_tile=max_batch_tile)

    x = x.astype(param_dtype)
    if M != batch:
        x = jnp.zeros((M, in_size), param_dtype).at[:batch].set(x)

    # --- VMEM budget for the whole-weight-resident strategy ---------------
    # Worst case (double-buffered weights if the single-buffer request is
    # rejected) + double-buffered x/out tiles + f32 fc1 activation tile.
    vmem_needed = (
        2 * ((in_size * H + H * N) * itemsize + (H + N) * 4)
        + 2 * tile_m * (in_size * itemsize + N * 4)
        + tile_m * H * 4)
    compiler_kwargs = {}
    if vmem_needed > 28 * 2**20:
        # Raise the 32 MiB scoped default with headroom.
        # TODO(synk): add an H/N-tiled grid fallback for hidden sizes whose
        # resident weights exceed physical VMEM (esp. v7x's 64 MiB).
        compiler_kwargs["vmem_limit_bytes"] = int(vmem_needed * 5 // 4)
    compiler_params = pltpu.CompilerParams(
        dimension_semantics=("parallel",), **compiler_kwargs)

    cost = pl.CostEstimate(
        flops=2 * M * (in_size * H + H * N),
        transcendentals=0,
        bytes_accessed=(M * in_size * itemsize
                        + (in_size * H + H * N) * itemsize
                        + (H + N) * 4
                        + M * N * 4),
    )

    def build(weight_pipeline_mode):
        def const_spec(shape):
            # Weights/biases: constant index_map -> VMEM-resident across batch
            # tiles; single-buffered when the backend supports Buffered(1).
            if weight_pipeline_mode is None:
                return pl.BlockSpec(shape, lambda i: (0, 0))
            return pl.BlockSpec(shape, lambda i: (0, 0),
                                pipeline_mode=weight_pipeline_mode)

        return pl.pallas_call(
            _mlp_kernel,
            out_shape=jax.ShapeDtypeStruct((M, N), jnp.float32),
            grid=(grid_m,),
            in_specs=[
                pl.BlockSpec((tile_m, in_size), lambda i: (i, 0)),  # x, K unpadded
                const_spec((in_size, H)),                           # W1
                const_spec((1, H)),                                 # b1 (f32)
                const_spec((H, N)),                                 # W2
                const_spec((1, N)),                                 # b2 (f32)
            ],
            out_specs=pl.BlockSpec((tile_m, N), lambda i: (i, 0)),  # lane-dense
            compiler_params=compiler_params,
            cost_estimate=cost,
        )

    try:
        # Preferred: single-buffer the constant weight/bias inputs.
        out_padded = build(pl.Buffered(1))(x, w1p, b1p, w2p, b2p)
    except Exception:
        # Fallback: default (double-buffered) pipelining — always compiles.
        out_padded = build(None)(x, w1p, b1p, w2p, b2p)

    return out_padded[:batch, :out_size]


# ---------------------------------------------------------------------------
# Reference + init (match nn.Linear's default U(-1/sqrt(fan_in), +1/sqrt(fan_in))).
# ---------------------------------------------------------------------------
def init_linear_params(key, in_features, out_features, dtype=jnp.float32):
    """Weight returned already transposed to [in, out] for the kernel layout."""
    kw, kb = jax.random.split(key)
    bound = 1.0 / (in_features ** 0.5)
    w = jax.random.uniform(kw, (in_features, out_features), dtype, -bound, bound)
    b = jax.random.uniform(kb, (1, out_features), dtype, -bound, bound)
    return w, b


def reference_forward(x, w1, b1, w2, b2):
    h = jnp.maximum(x @ w1 + b1, 0.0)
    return h @ w2 + b2


if __name__ == "__main__":
    # Small shapes consistent with SimpleModel(input_size, hidden_size, output_size).
    batch, input_size, hidden_size, output_size = 8, 32, 64, 16

    key = jax.random.PRNGKey(0)
    kx, k1, k2 = jax.random.split(key, 3)

    x = jax.random.normal(kx, (batch, input_size), jnp.float32)
    w1, b1 = init_linear_params(k1, input_size, hidden_size)
    w2, b2 = init_linear_params(k2, hidden_size, output_size)

    # One-time parameter padding / dtype cast (hoisted out of the forward).
    params = prepare_params(w1, b1, w2, b2)
    params = jax.block_until_ready(params)
    w1p, b1p, w2p, b2p = params

    out = simple_model_forward(x, w1p, b1p, w2p, b2p, out_size=output_size)
    out = jax.block_until_ready(out)

    ref = reference_forward(x, w1, b1, w2, b2)
    assert out.shape == (batch, output_size)
    if w1p.dtype == jnp.bfloat16:
        tol = dict(atol=5e-2, rtol=5e-2)   # bf16 MXU operands (v6e/v7x path)
    else:
        tol = dict(atol=1e-5, rtol=1e-5)   # full f32 path (v5e and older)
    assert jnp.allclose(out.astype(jnp.float32), ref, **tol), \
        "mismatch vs JAX reference"

    # TODO(synk): debug_api.log_tensor_stats / process_tensor are host-side
    # logging hooks with no effect on the returned tensor; intentionally omitted.
    print("KERNEL_OK")
</pallas_src>

<mosaic_0001>
module attributes {stable_mosaic.version = 11 : i64} {
  func.func @_mlp_kernel(%arg0: i32, %arg1: memref<16x32xbf16, #tpu.memory_space<vmem>>, %arg2: memref<32x128xbf16, #tpu.memory_space<vmem>>, %arg3: memref<1x128xf32, #tpu.memory_space<vmem>>, %arg4: memref<128x128xbf16, #tpu.memory_space<vmem>>, %arg5: memref<1x128xf32, #tpu.memory_space<vmem>>, %arg6: memref<16x128xf32, #tpu.memory_space<vmem>>) attributes {dimension_semantics = [#tpu.dimension_semantics<parallel>], iteration_bounds = array<i64: 1>, scalar_prefetch = 0 : i64, scratch_operands = 0 : i64, tpu.core_type = #tpu.core_type<tc>, window_params = [{transform_indices = @transform_0, window_bounds = array<i64: 16, 32>}, {pipeline_mode = #tpu.pipeline_mode<synchronous>, transform_indices = @transform_1, window_bounds = array<i64: 32, 128>}, {pipeline_mode = #tpu.pipeline_mode<synchronous>, transform_indices = @transform_2, window_bounds = array<i64: 1, 128>}, {pipeline_mode = #tpu.pipeline_mode<synchronous>, transform_indices = @transform_3, window_bounds = array<i64: 128, 128>}, {pipeline_mode = #tpu.pipeline_mode<synchronous>, transform_indices = @transform_4, window_bounds = array<i64: 1, 128>}, {transform_indices = @transform_5, window_bounds = array<i64: 16, 128>}]} {
    %c0 = arith.constant 0 : index
    %c0_0 = arith.constant 0 : index
    %0 = vector.load %arg1[%c0, %c0_0] : memref<16x32xbf16, #tpu.memory_space<vmem>>, vector<16x32xbf16>
    %c0_1 = arith.constant 0 : index
    %c0_2 = arith.constant 0 : index
    %1 = vector.load %arg2[%c0_1, %c0_2] : memref<32x128xbf16, #tpu.memory_space<vmem>>, vector<32x128xbf16>
    %cst = arith.constant dense<0.000000e+00> : vector<16x128xf32>
    %2 = tpu.matmul %0, %1, %cst {dimension_numbers = #tpu.dot_dimension_numbers<[1], [0], [0], [1], [0, 0, 1, 1], [], []>} : vector<16x32xbf16>, vector<32x128xbf16>, vector<16x128xf32> -> vector<16x128xf32>
    %c0_3 = arith.constant 0 : index
    %c0_4 = arith.constant 0 : index
    %3 = vector.load %arg3[%c0_3, %c0_4] : memref<1x128xf32, #tpu.memory_space<vmem>>, vector<1x128xf32>
    %4 = vector.broadcast %3 : vector<1x128xf32> to vector<16x128xf32>
    %5 = arith.addf %2, %4 : vector<16x128xf32>
    %cst_5 = arith.constant 0.000000e+00 : f32
    %6 = vector.broadcast %cst_5 : f32 to vector<16x128xf32>
    %7 = arith.maximumf %5, %6 : vector<16x128xf32>
    %8 = arith.truncf %7 : vector<16x128xf32> to vector<16x128xbf16>
    %c0_6 = arith.constant 0 : index
    %c0_7 = arith.constant 0 : index
    %9 = vector.load %arg4[%c0_6, %c0_7] : memref<128x128xbf16, #tpu.memory_space<vmem>>, vector<128x128xbf16>
    %cst_8 = arith.constant dense<0.000000e+00> : vector<16x128xf32>
    %10 = tpu.matmul %8, %9, %cst_8 {dimension_numbers = #tpu.dot_dimension_numbers<[1], [0], [0], [1], [0, 0, 1, 1], [], []>} : vector<16x128xbf16>, vector<128x128xbf16>, vector<16x128xf32> -> vector<16x128xf32>
    %c0_9 = arith.constant 0 : index
    %c0_10 = arith.constant 0 : index
    %11 = vector.load %arg5[%c0_9, %c0_10] : memref<1x128xf32, #tpu.memory_space<vmem>>, vector<1x128xf32>
    %12 = vector.broadcast %11 : vector<1x128xf32> to vector<16x128xf32>
    %13 = arith.addf %10, %12 : vector<16x128xf32>
    %c0_11 = arith.constant 0 : index
    %c0_12 = arith.constant 0 : index
    %14 = vector.load %arg6[%c0_11, %c0_12] : memref<16x128xf32, #tpu.memory_space<vmem>>, vector<16x128xf32>
    tpu.vector_store %arg6[%c0_11, %c0_12], %13 {strides = array<i32>} : memref<16x128xf32, #tpu.memory_space<vmem>>, vector<16x128xf32>,
    return
  }
  func.func @transform_0(%arg0: i32) -> (i32, i32) {
    %c0_i32 = arith.constant 0 : i32
    %c0_i32_0 = arith.constant 0 : i32
    return %arg0, %c0_i32 : i32, i32
  }
  func.func @transform_1(%arg0: i32) -> (i32, i32) {
    %c0_i32 = arith.constant 0 : i32
    %c0_i32_0 = arith.constant 0 : i32
    %c0_i32_1 = arith.constant 0 : i32
    return %c0_i32, %c0_i32_0 : i32, i32
  }
  func.func @transform_2(%arg0: i32) -> (i32, i32) {
    %c0_i32 = arith.constant 0 : i32
    %c0_i32_0 = arith.constant 0 : i32
    %c0_i32_1 = arith.constant 0 : i32
    return %c0_i32, %c0_i32_0 : i32, i32
  }
  func.func @transform_3(%arg0: i32) -> (i32, i32) {
    %c0_i32 = arith.constant 0 : i32
    %c0_i32_0 = arith.constant 0 : i32
    %c0_i32_1 = arith.constant 0 : i32
    return %c0_i32, %c0_i32_0 : i32, i32
  }
  func.func @transform_4(%arg0: i32) -> (i32, i32) {
    %c0_i32 = arith.constant 0 : i32
    %c0_i32_0 = arith.constant 0 : i32
    %c0_i32_1 = arith.constant 0 : i32
    return %c0_i32, %c0_i32_0 : i32, i32
  }
  func.func @transform_5(%arg0: i32) -> (i32, i32) {
    %c0_i32 = arith.constant 0 : i32
    %c0_i32_0 = arith.constant 0 : i32
    return %arg0, %c0_i32 : i32, i32
  }
}

module attributes {stable_mosaic.version = 11 : i64} {
  func.func @_mlp_kernel(%arg0: i32, %arg1: memref<16x32xbf16, #tpu.memory_space<vmem>>, %arg2: memref<32x128xbf16, #tpu.memory_space<vmem>>, %arg3: memref<1x128xf32, #tpu.memory_space<vmem>>, %arg4: memref<128x128xbf16, #tpu.memory_space<vmem>>, %arg5: memref<1x128xf32, #tpu.memory_space<vmem>>, %arg6: memref<16x128xf32, #tpu.memory_space<vmem>>) attributes {dimension_semantics = [#tpu.dimension_semantics<parallel>], iteration_bounds = array<i64: 1>, scalar_prefetch = 0 : i64, scratch_operands = 0 : i64, tpu.core_type = #tpu.core_type<tc>, window_params = [{transform_indices = @transform_0, window_bounds = array<i64: 16, 32>}, {pipeline_mode = #tpu.pipeline_mode<synchronous>, transform_indices = @transform_1, window_bounds = array<i64: 32, 128>}, {pipeline_mode = #tpu.pipeline_mode<synchronous>, transform_indices = @transform_2, window_bounds = array<i64: 1, 128>}, {pipeline_mode = #tpu.pipeline_mode<synchronous>, transform_indices = @transform_3, window_bounds = array<i64: 128, 128>}, {pipeline_mode = #tpu.pipeline_mode<synchronous>, transform_indices = @transform_4, window_bounds = array<i64: 1, 128>}, {transform_indices = @transform_5, window_bounds = array<i64: 16, 128>}]} {
    %c0 = arith.constant 0 : index
    %c0_0 = arith.constant 0 : index
    %0 = vector.load %arg1[%c0, %c0_0] : memref<16x32xbf16, #tpu.memory_space<vmem>>, vector<16x32xbf16>
    %c0_1 = arith.constant 0 : index
    %c0_2 = arith.constant 0 : index
    %1 = vector.load %arg2[%c0_1, %c0_2] : memref<32x128xbf16, #tpu.memory_space<vmem>>, vector<32x128xbf16>
    %cst = arith.constant dense<0.000000e+00> : vector<16x128xf32>
    %2 = tpu.matmul %0, %1, %cst {dimension_numbers = #tpu.dot_dimension_numbers<[1], [0], [0], [1], [0, 0, 1, 1], [], []>} : vector<16x32xbf16>, vector<32x128xbf16>, vector<16x128xf32> -> vector<16x128xf32>
    %c0_3 = arith.constant 0 : index
    %c0_4 = arith.constant 0 : index
    %3 = vector.load %arg3[%c0_3, %c0_4] : memref<1x128xf32, #tpu.memory_space<vmem>>, vector<1x128xf32>
    %4 = vector.broadcast %3 : vector<1x128xf32> to vector<16x128xf32>
    %5 = arith.addf %2, %4 : vector<16x128xf32>
    %cst_5 = arith.constant 0.000000e+00 : f32
    %6 = vector.broadcast %cst_5 : f32 to vector<16x128xf32>
    %7 = arith.maximumf %5, %6 : vector<16x128xf32>
    %8 = arith.truncf %7 : vector<16x128xf32> to vector<16x128xbf16>
    %c0_6 = arith.constant 0 : index
    %c0_7 = arith.constant 0 : index
    %9 = vector.load %arg4[%c0_6, %c0_7] : memref<128x128xbf16, #tpu.memory_space<vmem>>, vector<128x128xbf16>
    %cst_8 = arith.constant dense<0.000000e+00> : vector<16x128xf32>
    %10 = tpu.matmul %8, %9, %cst_8 {dimension_numbers = #tpu.dot_dimension_numbers<[1], [0], [0], [1], [0, 0, 1, 1], [], []>} : vector<16x128xbf16>, vector<128x128xbf16>, vector<16x128xf32> -> vector<16x128xf32>
    %c0_9 = arith.constant 0 : index
    %c0_10 = arith.constant 0 : index
    %11 = vector.load %arg5[%c0_9, %c0_10] : memref<1x128xf32, #tpu.memory_space<vmem>>, vector<1x128xf32>
    %12 = vector.broadcast %11 : vector<1x128xf32> to vector<16x128xf32>
    %13 = arith.addf %10, %12 : vector<16x128xf32>
    %c0_11 = arith.constant 0 : index
    %c0_12 = arith.constant 0 : index
    %14 = vector.load %arg6[%c0_11, %c0_12] : memref<16x128xf32, #tpu.memory_space<vmem>>, vector<16x128xf32>
    tpu.vector_store %arg6[%c0_11, %c0_12], %13 {strides = array<i32>} : memref<16x128xf32, #tpu.memory_space<vmem>>, vector<16x128xf32>,
    return
  }
  func.func @transform_0(%arg0: i32) -> (i32, i32) {
    %c0_i32 = arith.constant 0 : i32
    %c0_i32_0 = arith.constant 0 : i32
    return %arg0, %c0_i32 : i32, i32
  }
  func.func @transform_1(%arg0: i32) -> (i32, i32) {
    %c0_i32 = arith.constant 0 : i32
    %c0_i32_0 = arith.constant 0 : i32
    %c0_i32_1 = arith.constant 0 : i32
    return %c0_i32, %c0_i32_0 : i32, i32
  }
  func.func @transform_2(%arg0: i32) -> (i32, i32) {
    %c0_i32 = arith.constant 0 : i32
    %c0_i32_0 = arith.constant 0 : i32
    %c0_i32_1 = arith.constant 0 : i32
    return %c0_i32, %c0_i32_0 : i32, i32
  }
  func.func @transform_3(%arg0: i32) -> (i32, i32) {
    %c0_i32 = arith.constant 0 : i32
    %c0_i32_0 = arith.constant 0 : i32
    %c0_i32_1 = arith.constant 0 : i32
    return %c0_i32, %c0_i32_0 : i32, i32
  }
  func.func @transform_4(%arg0: i32) -> (i32, i32) {
    %c0_i32 = arith.constant 0 : i32
    %c0_i32_0 = arith.constant 0 : i32
    %c0_i32_1 = arith.constant 0 : i32
    return %c0_i32, %c0_i32_0 : i32, i32
  }
  func.func @transform_5(%arg0: i32) -> (i32, i32) {
    %c0_i32 = arith.constant 0 : i32
    %c0_i32_0 = arith.constant 0 : i32
    return %arg0, %c0_i32 : i32, i32
  }
}

</mosaic_0001>

<llo_original>
// kernel: tpu_custom_call.1
$region0: #{tpu_custom_call.1}
  #allocation0 [shape = 'u32[]', space=smem, size = 0x4, offset = 0x4, fixed_abs, tag = 'smem constant byte address 0x4 - core index']
  #allocation1 [shape = 'u32[144,128]{1,0:T(1,128)}', space=vmem, size = 0x12000, scoped, tag = 'internal scratch']
  %s0 = inlined_call_operand.hbm [shape: bf16[16,32], index: 0, kind: input, shape index: {}]
  %s1 = inlined_call_operand.hbm [shape: bf16[32,128], index: 1, kind: input, shape index: {}]
  %s2 = inlined_call_operand.vmem [shape: f32[1,128], index: 2, kind: input, shape index: {}]
  %s3 = inlined_call_operand.hbm [shape: bf16[128,128], index: 3, kind: input, shape index: {}]
  %s4 = inlined_call_operand.vmem [shape: f32[1,128], index: 4, kind: input, shape index: {}]
  %s5 = inlined_call_operand.hbm [shape: f32[16,128], index: 5, kind: output, shape index: {}]
  %s6 = sld [smem:[#allocation0]]
  $region42: #{tpu_custom_call.1} parent=0
    _
  %s8 = ssub.s32 1, %s6
  %s9 = scalar_select 0, %s8, %s6
  $region1: #{tpu_custom_call.1} parent=0
    #allocation2 [shape = 'u8[4096]{0}', space=vmem, size = 0x1000, scoped, tag = 'input window, operand 0, single buffered']
    #allocation3 [shape = 's32[1]{0}', space=sflag, size = 0x4, scoped, tag = 'scoped memory for tpu_custom_call.1']
    #allocation4 [shape = 's32[1]{0}', space=sflag, size = 0x4, scoped, tag = 'scoped memory for tpu_custom_call.1']
    #allocation5 [shape = 'u8[8192]{0}', space=vmem, size = 0x2000, scoped, tag = 'input window, operand 1, single buffered']
    #allocation6 [shape = 's32[1]{0}', space=sflag, size = 0x4, scoped, tag = 'scoped memory for tpu_custom_call.1']
    #allocation7 [shape = 'u8[32768]{0}', space=vmem, size = 0x8000, scoped, tag = 'input window, operand 3, single buffered']
    #allocation8 [shape = 'u8[8192]{0}', space=vmem, size = 0x2000, scoped, tag = 'output window, operand 0, single buffered']
    %10 = vsyncpa [#allocation3], 0
    %11 = vsyncpa [#allocation6], 0
    %12 = vsyncpa [#allocation4], 0
    // Predicated region
    $region2: #{tpu_custom_call.1} parent=1 // pred_check
      _
    $region3: #{tpu_custom_call.1} parent=1 // pred_check_branch
      %14 = sbr.rel (0) target = $region5
    $region4: #{tpu_custom_call.1} parent=1 // pred_region
      %s16 = ssub.s32 128, 128
      %17 = vsyncadd [#allocation3], %s16
      %s18 = sshll.u32 [#allocation2], 4
      %s19 = int_to_ptr.vmem [resolvable:$true] %s18
      %24 = dma.hbm_to_vmem [thread:$0]  %s0, 128, %s19, [#allocation3], 64, 64, 4
    $region5: #{tpu_custom_call.1} parent=1 // pred_fallthru
      _
    // Predicated region
    $region6: #{tpu_custom_call.1} parent=1 // pred_check
      _
    $region7: #{tpu_custom_call.1} parent=1 // pred_check_branch
      %26 = sbr.rel (0) target = $region9
    $region8: #{tpu_custom_call.1} parent=1 // pred_region
      %s28 = ssub.s32 256, 256
      %29 = vsyncadd [#allocation6], %s28
      %s30 = sshll.u32 [#allocation5], 4
      %s31 = int_to_ptr.vmem [resolvable:$true] %s30
      %36 = dma.hbm_to_vmem [thread:$0]  %s1, 256, %s31, [#allocation6], 64, 64, 4
    $region9: #{tpu_custom_call.1} parent=1 // pred_fallthru
      _
    // Predicated region
    $region10: #{tpu_custom_call.1} parent=1 // pred_check
      _
    $region11: #{tpu_custom_call.1} parent=1 // pred_check_branch
      %38 = sbr.rel (0) target = $region13
    $region12: #{tpu_custom_call.1} parent=1 // pred_region
      _
    $region13: #{tpu_custom_call.1} parent=1 // pred_fallthru
      _
    // Predicated region
    $region14: #{tpu_custom_call.1} parent=1 // pred_check
      _
    $region15: #{tpu_custom_call.1} parent=1 // pred_check_branch
      %40 = sbr.rel (0) target = $region17
    $region16: #{tpu_custom_call.1} parent=1 // pred_region
      %s42 = ssub.s32 1024, 1024
      %43 = vsyncadd [#allocation6], %s42
      %s44 = sshll.u32 [#allocation7], 4
      %s45 = int_to_ptr.vmem [resolvable:$true] %s44
      %50 = dma.hbm_to_vmem [thread:$0]  %s3, 1024, %s45, [#allocation6], 64, 64, 4
    $region17: #{tpu_custom_call.1} parent=1 // pred_fallthru
      _
    // Predicated region
    $region18: #{tpu_custom_call.1} parent=1 // pred_check
      _
    $region19: #{tpu_custom_call.1} parent=1 // pred_check_branch
      %52 = sbr.rel (0) target = $region21
    $region20: #{tpu_custom_call.1} parent=1 // pred_region
      _
    $region21: #{tpu_custom_call.1} parent=1 // pred_fallthru
      _
    // Predicated region
    $region22: #{tpu_custom_call.1} parent=1 // pred_check
      _
    $region23: #{tpu_custom_call.1} parent=1 // pred_check_branch
      %54 = sbr.rel (0) target = $region25
    $region24: #{tpu_custom_call.1} parent=1 // pred_region
      %55 = dma.done [#allocation3], 128
    $region25: #{tpu_custom_call.1} parent=1 // pred_fallthru
      _
    // Predicated region
    $region26: #{tpu_custom_call.1} parent=1 // pred_check
      _
    $region27: #{tpu_custom_call.1} parent=1 // pred_check_branch
      %57 = sbr.rel (0) target = $region29
    $region28: #{tpu_custom_call.1} parent=1 // pred_region
      %58 = dma.done [#allocation6], 256
    $region29: #{tpu_custom_call.1} parent=1 // pred_fallthru
      _
    // Predicated region
    $region30: #{tpu_custom_call.1} parent=1 // pred_check
      _
    $region31: #{tpu_custom_call.1} parent=1 // pred_check_branch
      %60 = sbr.rel (0) target = $region33
    $region32: #{tpu_custom_call.1} parent=1 // pred_region
      %61 = dma.done [#allocation6], 1024
    $region33: #{tpu_custom_call.1} parent=1 // pred_fallthru
      _
    %v63 = vld [vmem:[#allocation2] sm:$0xf]
    %v64 = vld [vmem:[#allocation2 + $0x4] sm:$0xf]
    %v65 = vld [vmem:[#allocation5] sm:$0xf]
    %v66 = vld [vmem:[#allocation5 + $0x4] sm:$0xf]
    %v67 = vld [vmem:[#allocation5 + $0x8] sm:$0xf]
    %v68 = vld [vmem:[#allocation5 + $0xc] sm:$0xf]
    %v69 = vld [vmem:[%s2] sm:$0x1]
    %v71 = vlaneseq
    %v72 = vshrl.u32 %v71, 7
    %v73 = vsub.s32 0, %v72
    %v74 = vrot.slane %v69, %v73
    %v78 = vunpack.c.l.b16 %v63
    %v79 = vunpack.c.l.b16 %v64
    %v80 = vpack.c.b16 %v79, %v78
    %v85 = vunpack.c.l.b16 %v65
    %v86 = vunpack.c.l.b16 %v66
    %v87 = vunpack.c.l.b16 %v67
    %v88 = vunpack.c.l.b16 %v68
    %v89 = vpack.c.b16 %v86, %v85
    %v90 = vpack.c.b16 %v88, %v87
    %vm93 = vcmask 261120
    %v95 = vsel %vm93, %v80, 0
    %97 = vmatprep.subr.bf16.mxu0 0
    %98 = vmatpush1.bf16.msra.mxu0 0
    %99 = vmatprep.subr.bf16.mxu0 0
    %100 = vmatpush1.bf16.msra.mxu0 0
    %101 = vmatprep.subr.bf16.mxu0 0
    %102 = vmatpush1.bf16.msra.mxu0 0
    %103 = vmatprep.subr.bf16.mxu0 0
    %104 = vmatpush1.bf16.msra.mxu0 0
    %105 = vmatprep.subr.bf16.mxu0 0
    %106 = vmatpush1.bf16.msra.mxu0 0
    %107 = vmatprep.subr.bf16.mxu0 0
    %108 = vmatpush1.bf16.msra.mxu0 0
    %109 = vmatprep.subr.bf16.mxu0 0
    %110 = vmatpush1.bf16.msra.mxu0 %v90
    %111 = vmatprep.subr.bf16.mxu0 0
    %112 = vmatpush1.bf16.msra.mxu0 %v89
    %113 = vmatprep.subr.bf16.mxu0 0
    %114 = vmatpush2.bf16.msra.mxu0 0
    %115 = vmatprep.subr.bf16.mxu0 0
    %116 = vmatpush2.bf16.msra.mxu0 0
    %117 = vmatprep.subr.bf16.mxu0 0
    %118 = vmatpush2.bf16.msra.mxu0 0
    %119 = vmatprep.subr.bf16.mxu0 0
    %120 = vmatpush2.bf16.msra.mxu0 0
    %121 = vmatprep.subr.bf16.mxu0 0
    %122 = vmatpush2.bf16.msra.mxu0 0
    %123 = vmatprep.subr.bf16.mxu0 0
    %124 = vmatpush2.bf16.msra.mxu0 0
    %125 = vmatprep.subr.bf16.mxu0 0
    %126 = vmatpush2.bf16.msra.mxu0 0
    %127 = vmatprep.subr.bf16.mxu0 0
    %128 = vmatpush2.bf16.msra.mxu0 0
    %129 = vmatprep.mubr.bf16.mxu0 0
    %130 = vmatmul.mubr.bf16.gmra.mxu0 %v95
    %v131 = vpop.f32.mrf.mxu0
    %v132 = vadd.f32 %v74, %v131
    %v133 = vpop.f32.mrf.mxu0
    %v134 = vpop.f32.mrf.mxu0
    %v135 = vadd.f32 %v74, %v134
    %v136 = vpop.f32.mrf.mxu0
    %137 = vdwg.mxu0
    %v138 = vmax.f32 %v132, 0.0
    %v139 = vmax.f32 %v135, 0.0
    %v140 = vpack.c.bf16 %v139, %v138
    %v141 = vld [vmem:[#allocation7] sm:$0xf]
    %v142 = vld [vmem:[#allocation7 + $0x4] sm:$0xf]
    %v143 = vld [vmem:[#allocation7 + $0x8] sm:$0xf]
    %v144 = vld [vmem:[#allocation7 + $0xc] sm:$0xf]
    %v145 = vld [vmem:[#allocation7 + $0x10] sm:$0xf]
    %v146 = vld [vmem:[#allocation7 + $0x14] sm:$0xf]
    %v147 = vld [vmem:[#allocation7 + $0x18] sm:$0xf]
    %v148 = vld [vmem:[#allocation7 + $0x1c] sm:$0xf]
    %v149 = vld [vmem:[#allocation7 + $0x20] sm:$0xf]
    %v150 = vld [vmem:[#allocation7 + $0x24] sm:$0xf]
    %v151 = vld [vmem:[#allocation7 + $0x28] sm:$0xf]
    %v152 = vld [vmem:[#allocation7 + $0x2c] sm:$0xf]
    %v153 = vld [vmem:[#allocation7 + $0x30] sm:$0xf]
    %v154 = vld [vmem:[#allocation7 + $0x34] sm:$0xf]
    %v155 = vld [vmem:[#allocation7 + $0x38] sm:$0xf]
    %v156 = vld [vmem:[#allocation7 + $0x3c] sm:$0xf]
    %v157 = vld [vmem:[%s4] sm:$0x1]
    %v159 = vlaneseq
    %v160 = vshrl.u32 %v159, 7
    %v161 = vsub.s32 0, %v160
    %v162 = vrot.slane %v157, %v161
    %v180 = vunpack.c.l.b16 %v141
    %v181 = vunpack.c.l.b16 %v142
    %v182 = vunpack.c.l.b16 %v143
    %v183 = vunpack.c.l.b16 %v144
    %v184 = vunpack.c.l.b16 %v145
    %v185 = vunpack.c.l.b16 %v146
    %v186 = vunpack.c.l.b16 %v147
    %v187 = vunpack.c.l.b16 %v148
    %v188 = vunpack.c.l.b16 %v149
    %v189 = vunpack.c.l.b16 %v150
    %v190 = vunpack.c.l.b16 %v151
    %v191 = vunpack.c.l.b16 %v152
    %v192 = vunpack.c.l.b16 %v153
    %v193 = vunpack.c.l.b16 %v154
    %v194 = vunpack.c.l.b16 %v155
    %v195 = vunpack.c.l.b16 %v156
    %v196 = vpack.c.b16 %v181, %v180
    %v197 = vpack.c.b16 %v183, %v182
    %v198 = vpack.c.b16 %v185, %v184
    %v199 = vpack.c.b16 %v187, %v186
    %v200 = vpack.c.b16 %v189, %v188
    %v201 = vpack.c.b16 %v191, %v190
    %v202 = vpack.c.b16 %v193, %v192
    %v203 = vpack.c.b16 %v195, %v194
    %212 = vmatprep.subr.bf16.mxu0 0
    %213 = vmatpush1.bf16.msra.mxu0 %v203
    %214 = vmatprep.subr.bf16.mxu0 0
    %215 = vmatpush1.bf16.msra.mxu0 %v202
    %216 = vmatprep.subr.bf16.mxu0 0
    %217 = vmatpush1.bf16.msra.mxu0 %v201
    %218 = vmatprep.subr.bf16.mxu0 0
    %219 = vmatpush1.bf16.msra.mxu0 %v200
    %220 = vmatprep.subr.bf16.mxu0 0
    %221 = vmatpush1.bf16.msra.mxu0 %v199
    %222 = vmatprep.subr.bf16.mxu0 0
    %223 = vmatpush1.bf16.msra.mxu0 %v198
    %224 = vmatprep.subr.bf16.mxu0 0
    %225 = vmatpush1.bf16.msra.mxu0 %v197
    %226 = vmatprep.subr.bf16.mxu0 0
    %227 = vmatpush1.bf16.msra.mxu0 %v196
    %228 = vmatprep.subr.bf16.mxu0 0
    %229 = vmatpush2.bf16.msra.mxu0 0
    %230 = vmatprep.subr.bf16.mxu0 0
    %231 = vmatpush2.bf16.msra.mxu0 0
    %232 = vmatprep.subr.bf16.mxu0 0
    %233 = vmatpush2.bf16.msra.mxu0 0
    %234 = vmatprep.subr.bf16.mxu0 0
    %235 = vmatpush2.bf16.msra.mxu0 0
    %236 = vmatprep.subr.bf16.mxu0 0
    %237 = vmatpush2.bf16.msra.mxu0 0
    %238 = vmatprep.subr.bf16.mxu0 0
    %239 = vmatpush2.bf16.msra.mxu0 0
    %240 = vmatprep.subr.bf16.mxu0 0
    %241 = vmatpush2.bf16.msra.mxu0 0
    %242 = vmatprep.subr.bf16.mxu0 0
    %243 = vmatpush2.bf16.msra.mxu0 0
    %244 = vmatprep.mubr.bf16.mxu0 0
    %245 = vmatmul.mubr.bf16.gmra.mxu0 %v140
    %v246 = vpop.f32.mrf.mxu0
    %v247 = vadd.f32 %v162, %v246
    %v248 = vpop.f32.mrf.mxu0
    %v249 = vpop.f32.mrf.mxu0
    %v250 = vadd.f32 %v162, %v249
    %v251 = vpop.f32.mrf.mxu0
    %252 = vdwg.mxu0
    %253 = vst [vmem:[#allocation8] sm:$0xff] %v247
    %254 = vst [vmem:[#allocation8 + $0x8] sm:$0xff] %v250
    // Predicated region
    $region34: #{tpu_custom_call.1} parent=1 // pred_check
      _
    $region35: #{tpu_custom_call.1} parent=1 // pred_check_branch
      %256 = sbr.rel (0) target = $region37
    $region36: #{tpu_custom_call.1} parent=1 // pred_region
      %s258 = ssub.s32 256, 256
      %259 = vsyncadd [#allocation4], %s258
      %s260 = sshll.u32 [#allocation8], 4
      %s261 = int_to_ptr.vmem [resolvable:$true] %s260
      %266 = dma.vmem_to_hbm [thread:$0]  %s261, 256, %s5, [#allocation4], 128, 128, 8
    $region37: #{tpu_custom_call.1} parent=1 // pred_fallthru
      _
    // Predicated region
    $region38: #{tpu_custom_call.1} parent=1 // pred_check
      _
    $region39: #{tpu_custom_call.1} parent=1 // pred_check_branch
      %268 = sbr.rel (0) target = $region41
    $region40: #{tpu_custom_call.1} parent=1 // pred_region
      %269 = dma.done [#allocation4], 256
    $region41: #{tpu_custom_call.1} parent=1 // pred_fallthru
      _
    %270 = vsyncpa [#allocation3], 1
    %271 = vsyncpa [#allocation6], 1
    %272 = vsyncpa [#allocation4], 1

// kernel: tpu_custom_call.1
$region0: #{tpu_custom_call.1}
  #allocation0 [shape = 'u32[]', space=smem, size = 0x4, offset = 0x4, fixed_abs, tag = 'smem constant byte address 0x4 - core index']
  #allocation1 [shape = 'u32[144,128]{1,0:T(1,128)}', space=vmem, size = 0x12000, scoped, tag = 'internal scratch']
  %s0 = inlined_call_operand.hbm [shape: bf16[16,32], index: 0, kind: input, shape index: {}]
  %s1 = inlined_call_operand.hbm [shape: bf16[32,128], index: 1, kind: input, shape index: {}]
  %s2 = inlined_call_operand.vmem [shape: f32[1,128], index: 2, kind: input, shape index: {}]
  %s3 = inlined_call_operand.hbm [shape: bf16[128,128], index: 3, kind: input, shape index: {}]
  %s4 = inlined_call_operand.vmem [shape: f32[1,128], index: 4, kind: input, shape index: {}]
  %s5 = inlined_call_operand.hbm [shape: f32[16,128], index: 5, kind: output, shape index: {}]
  %s6 = sld [smem:[#allocation0]]
  $region42: #{tpu_custom_call.1} parent=0
    _
  %s8 = ssub.s32 1, %s6
  %s9 = scalar_select 0, %s8, %s6
  $region1: #{tpu_custom_call.1} parent=0
    #allocation2 [shape = 'u8[4096]{0}', space=vmem, size = 0x1000, scoped, tag = 'input window, operand 0, single buffered']
    #allocation3 [shape = 's32[1]{0}', space=sflag, size = 0x4, scoped, tag = 'scoped memory for tpu_custom_call.1']
    #allocation4 [shape = 's32[1]{0}', space=sflag, size = 0x4, scoped, tag = 'scoped memory for tpu_custom_call.1']
    #allocation5 [shape = 'u8[8192]{0}', space=vmem, size = 0x2000, scoped, tag = 'input window, operand 1, single buffered']
    #allocation6 [shape = 's32[1]{0}', space=sflag, size = 0x4, scoped, tag = 'scoped memory for tpu_custom_call.1']
    #allocation7 [shape = 'u8[32768]{0}', space=vmem, size = 0x8000, scoped, tag = 'input window, operand 3, single buffered']
    #allocation8 [shape = 'u8[8192]{0}', space=vmem, size = 0x2000, scoped, tag = 'output window, operand 0, single buffered']
    %10 = vsyncpa [#allocation3], 0
    %11 = vsyncpa [#allocation6], 0
    %12 = vsyncpa [#allocation4], 0
    // Predicated region
    $region2: #{tpu_custom_call.1} parent=1 // pred_check
      _
    $region3: #{tpu_custom_call.1} parent=1 // pred_check_branch
      %14 = sbr.rel (0) target = $region5
    $region4: #{tpu_custom_call.1} parent=1 // pred_region
      %s16 = ssub.s32 128, 128
      %17 = vsyncadd [#allocation3], %s16
      %s18 = sshll.u32 [#allocation2], 4
      %s19 = int_to_ptr.vmem [resolvable:$true] %s18
      %24 = dma.hbm_to_vmem [thread:$0]  %s0, 128, %s19, [#allocation3], 64, 64, 4
    $region5: #{tpu_custom_call.1} parent=1 // pred_fallthru
      _
    // Predicated region
    $region6: #{tpu_custom_call.1} parent=1 // pred_check
      _
    $region7: #{tpu_custom_call.1} parent=1 // pred_check_branch
      %26 = sbr.rel (0) target = $region9
    $region8: #{tpu_custom_call.1} parent=1 // pred_region
      %s28 = ssub.s32 256, 256
      %29 = vsyncadd [#allocation6], %s28
      %s30 = sshll.u32 [#allocation5], 4
      %s31 = int_to_ptr.vmem [resolvable:$true] %s30
      %36 = dma.hbm_to_vmem [thread:$0]  %s1, 256, %s31, [#allocation6], 64, 64, 4
    $region9: #{tpu_custom_call.1} parent=1 // pred_fallthru
      _
    // Predicated region
    $region10: #{tpu_custom_call.1} parent=1 // pred_check
      _
    $region11: #{tpu_custom_call.1} parent=1 // pred_check_branch
      %38 = sbr.rel (0) target = $region13
    $region12: #{tpu_custom_call.1} parent=1 // pred_region
      _
    $region13: #{tpu_custom_call.1} parent=1 // pred_fallthru
      _
    // Predicated region
    $region14: #{tpu_custom_call.1} parent=1 // pred_check
      _
    $region15: #{tpu_custom_call.1} parent=1 // pred_check_branch
      %40 = sbr.rel (0) target = $region17
    $region16: #{tpu_custom_call.1} parent=1 // pred_region
      %s42 = ssub.s32 1024, 1024
      %43 = vsyncadd [#allocation6], %s42
      %s44 = sshll.u32 [#allocation7], 4
      %s45 = int_to_ptr.vmem [resolvable:$true] %s44
      %50 = dma.hbm_to_vmem [thread:$0]  %s3, 1024, %s45, [#allocation6], 64, 64, 4
    $region17: #{tpu_custom_call.1} parent=1 // pred_fallthru
      _
    // Predicated region
    $region18: #{tpu_custom_call.1} parent=1 // pred_check
      _
    $region19: #{tpu_custom_call.1} parent=1 // pred_check_branch
      %52 = sbr.rel (0) target = $region21
    $region20: #{tpu_custom_call.1} parent=1 // pred_region
      _
    $region21: #{tpu_custom_call.1} parent=1 // pred_fallthru
      _
    // Predicated region
    $region22: #{tpu_custom_call.1} parent=1 // pred_check
      _
    $region23: #{tpu_custom_call.1} parent=1 // pred_check_branch
      %54 = sbr.rel (0) target = $region25
    $region24: #{tpu_custom_call.1} parent=1 // pred_region
      %55 = dma.done [#allocation3], 128
    $region25: #{tpu_custom_call.1} parent=1 // pred_fallthru
      _
    // Predicated region
    $region26: #{tpu_custom_call.1} parent=1 // pred_check
      _
    $region27: #{tpu_custom_call.1} parent=1 // pred_check_branch
      %57 = sbr.rel (0) target = $region29
    $region28: #{tpu_custom_call.1} parent=1 // pred_region
      %58 = dma.done [#allocation6], 256
    $region29: #{tpu_custom_call.1} parent=1 // pred_fallthru
      _
    // Predicated region
    $region30: #{tpu_custom_call.1} parent=1 // pred_check
      _
    $region31: #{tpu_custom_call.1} parent=1 // pred_check_branch
      %60 = sbr.rel (0) target = $region33
    $region32: #{tpu_custom_call.1} parent=1 // pred_region
      %61 = dma.done [#allocation6], 1024
    $region33: #{tpu_custom_call.1} parent=1 // pred_fallthru
      _
    %v63 = vld [vmem:[#allocation2] sm:$0xf]
    %v64 = vld [vmem:[#allocation2 + $0x4] sm:$0xf]
    %v65 = vld [vmem:[#allocation5] sm:$0xf]
    %v66 = vld [vmem:[#allocation5 + $0x4] sm:$0xf]
    %v67 = vld [vmem:[#allocation5 + $0x8] sm:$0xf]
    %v68 = vld [vmem:[#allocation5 + $0xc] sm:$0xf]
    %v69 = vld [vmem:[%s2] sm:$0x1]
    %v71 = vlaneseq
    %v72 = vshrl.u32 %v71, 7
    %v73 = vsub.s32 0, %v72
    %v74 = vrot.slane %v69, %v73
    %v78 = vunpack.c.l.b16 %v63
    %v79 = vunpack.c.l.b16 %v64
    %v80 = vpack.c.b16 %v79, %v78
    %v85 = vunpack.c.l.b16 %v65
    %v86 = vunpack.c.l.b16 %v66
    %v87 = vunpack.c.l.b16 %v67
    %v88 = vunpack.c.l.b16 %v68
    %v89 = vpack.c.b16 %v86, %v85
    %v90 = vpack.c.b16 %v88, %v87
    %vm93 = vcmask 261120
    %v95 = vsel %vm93, %v80, 0
    %97 = vmatprep.subr.bf16.mxu0 0
    %98 = vmatpush1.bf16.msra.mxu0 0
    %99 = vmatprep.subr.bf16.mxu0 0
    %100 = vmatpush1.bf16.msra.mxu0 0
    %101 = vmatprep.subr.bf16.mxu0 0
    %102 = vmatpush1.bf16.msra.mxu0 0
    %103 = vmatprep.subr.bf16.mxu0 0
    %104 = vmatpush1.bf16.msra.mxu0 0
    %105 = vmatprep.subr.bf16.mxu0 0
    %106 = vmatpush1.bf16.msra.mxu0 0
    %107 = vmatprep.subr.bf16.mxu0 0
    %108 = vmatpush1.bf16.msra.mxu0 0
    %109 = vmatprep.subr.bf16.mxu0 0
    %110 = vmatpush1.bf16.msra.mxu0 %v90
    %111 = vmatprep.subr.bf16.mxu0 0
    %112 = vmatpush1.bf16.msra.mxu0 %v89
    %113 = vmatprep.subr.bf16.mxu0 0
    %114 = vmatpush2.bf16.msra.mxu0 0
    %115 = vmatprep.subr.bf16.mxu0 0
    %116 = vmatpush2.bf16.msra.mxu0 0
    %117 = vmatprep.subr.bf16.mxu0 0
    %118 = vmatpush2.bf16.msra.mxu0 0
    %119 = vmatprep.subr.bf16.mxu0 0
    %120 = vmatpush2.bf16.msra.mxu0 0
    %121 = vmatprep.subr.bf16.mxu0 0
    %122 = vmatpush2.bf16.msra.mxu0 0
    %123 = vmatprep.subr.bf16.mxu0 0
    %124 = vmatpush2.bf16.msra.mxu0 0
    %125 = vmatprep.subr.bf16.mxu0 0
    %126 = vmatpush2.bf16.msra.mxu0 0
    %127 = vmatprep.subr.bf16.mxu0 0
    %128 = vmatpush2.bf16.msra.mxu0 0
    %129 = vmatprep.mubr.bf16.mxu0 0
    %130 = vmatmul.mubr.bf16.gmra.mxu0 %v95
    %v131 = vpop.f32.mrf.mxu0
    %v132 = vadd.f32 %v74, %v131
    %v133 = vpop.f32.mrf.mxu0
    %v134 = vpop.f32.mrf.mxu0
    %v135 = vadd.f32 %v74, %v134
    %v136 = vpop.f32.mrf.mxu0
    %137 = vdwg.mxu0
    %v138 = vmax.f32 %v132, 0.0
    %v139 = vmax.f32 %v135, 0.0
    %v140 = vpack.c.bf16 %v139, %v138
    %v141 = vld [vmem:[#allocation7] sm:$0xf]
    %v142 = vld [vmem:[#allocation7 + $0x4] sm:$0xf]
    %v143 = vld [vmem:[#allocation7 + $0x8] sm:$0xf]
    %v144 = vld [vmem:[#allocation7 + $0xc] sm:$0xf]
    %v145 = vld [vmem:[#allocation7 + $0x10] sm:$0xf]
    %v146 = vld [vmem:[#allocation7 + $0x14] sm:$0xf]
    %v147 = vld [vmem:[#allocation7 + $0x18] sm:$0xf]
    %v148 = vld [vmem:[#allocation7 + $0x1c] sm:$0xf]
    %v149 = vld [vmem:[#allocation7 + $0x20] sm:$0xf]
    %v150 = vld [vmem:[#allocation7 + $0x24] sm:$0xf]
    %v151 = vld [vmem:[#allocation7 + $0x28] sm:$0xf]
    %v152 = vld [vmem:[#allocation7 + $0x2c] sm:$0xf]
    %v153 = vld [vmem:[#allocation7 + $0x30] sm:$0xf]
    %v154 = vld [vmem:[#allocation7 + $0x34] sm:$0xf]
    %v155 = vld [vmem:[#allocation7 + $0x38] sm:$0xf]
    %v156 = vld [vmem:[#allocation7 + $0x3c] sm:$0xf]
    %v157 = vld [vmem:[%s4] sm:$0x1]
    %v159 = vlaneseq
    %v160 = vshrl.u32 %v159, 7
    %v161 = vsub.s32 0, %v160
    %v162 = vrot.slane %v157, %v161
    %v180 = vunpack.c.l.b16 %v141
    %v181 = vunpack.c.l.b16 %v142
    %v182 = vunpack.c.l.b16 %v143
    %v183 = vunpack.c.l.b16 %v144
    %v184 = vunpack.c.l.b16 %v145
    %v185 = vunpack.c.l.b16 %v146
    %v186 = vunpack.c.l.b16 %v147
    %v187 = vunpack.c.l.b16 %v148
    %v188 = vunpack.c.l.b16 %v149
    %v189 = vunpack.c.l.b16 %v150
    %v190 = vunpack.c.l.b16 %v151
    %v191 = vunpack.c.l.b16 %v152
    %v192 = vunpack.c.l.b16 %v153
    %v193 = vunpack.c.l.b16 %v154
    %v194 = vunpack.c.l.b16 %v155
    %v195 = vunpack.c.l.b16 %v156
    %v196 = vpack.c.b16 %v181, %v180
    %v197 = vpack.c.b16 %v183, %v182
    %v198 = vpack.c.b16 %v185, %v184
    %v199 = vpack.c.b16 %v187, %v186
    %v200 = vpack.c.b16 %v189, %v188
    %v201 = vpack.c.b16 %v191, %v190
    %v202 = vpack.c.b16 %v193, %v192
    %v203 = vpack.c.b16 %v195, %v194
    %212 = vmatprep.subr.bf16.mxu0 0
    %213 = vmatpush1.bf16.msra.mxu0 %v203
    %214 = vmatprep.subr.bf16.mxu0 0
    %215 = vmatpush1.bf16.msra.mxu0 %v202
    %216 = vmatprep.subr.bf16.mxu0 0
    %217 = vmatpush1.bf16.msra.mxu0 %v201
    %218 = vmatprep.subr.bf16.mxu0 0
    %219 = vmatpush1.bf16.msra.mxu0 %v200
    %220 = vmatprep.subr.bf16.mxu0 0
    %221 = vmatpush1.bf16.msra.mxu0 %v199
    %222 = vmatprep.subr.bf16.mxu0 0
    %223 = vmatpush1.bf16.msra.mxu0 %v198
    %224 = vmatprep.subr.bf16.mxu0 0
    %225 = vmatpush1.bf16.msra.mxu0 %v197
    %226 = vmatprep.subr.bf16.mxu0 0
    %227 = vmatpush1.bf16.msra.mxu0 %v196
    %228 = vmatprep.subr.bf16.mxu0 0
    %229 = vmatpush2.bf16.msra.mxu0 0
    %230 = vmatprep.subr.bf16.mxu0 0
    %231 = vmatpush2.bf16.msra.mxu0 0
    %232 = vmatprep.subr.bf16.mxu0 0
    %233 = vmatpush2.bf16.msra.mxu0 0
    %234 = vmatprep.subr.bf16.mxu0 0
    %235 = vmatpush2.bf16.msra.mxu0 0
    %236 = vmatprep.subr.bf16.mxu0 0
    %237 = vmatpush2.bf16.msra.mxu0 0
    %238 = vmatprep.subr.bf16.mxu0 0
    %239 = vmatpush2.bf16.msra.mxu0 0
    %240 = vmatprep.subr.bf16.mxu0 0
    %241 = vmatpush2.bf16.msra.mxu0 0
    %242 = vmatprep.subr.bf16.mxu0 0
    %243 = vmatpush2.bf16.msra.mxu0 0
    %244 = vmatprep.mubr.bf16.mxu0 0
    %245 = vmatmul.mubr.bf16.gmra.mxu0 %v140
    %v246 = vpop.f32.mrf.mxu0
    %v247 = vadd.f32 %v162, %v246
    %v248 = vpop.f32.mrf.mxu0
    %v249 = vpop.f32.mrf.mxu0
    %v250 = vadd.f32 %v162, %v249
    %v251 = vpop.f32.mrf.mxu0
    %252 = vdwg.mxu0
    %253 = vst [vmem:[#allocation8] sm:$0xff] %v247
    %254 = vst [vmem:[#allocation8 + $0x8] sm:$0xff] %v250
    // Predicated region
    $region34: #{tpu_custom_call.1} parent=1 // pred_check
      _
    $region35: #{tpu_custom_call.1} parent=1 // pred_check_branch
      %256 = sbr.rel (0) target = $region37
    $region36: #{tpu_custom_call.1} parent=1 // pred_region
      %s258 = ssub.s32 256, 256
      %259 = vsyncadd [#allocation4], %s258
      %s260 = sshll.u32 [#allocation8], 4
      %s261 = int_to_ptr.vmem [resolvable:$true] %s260
      %266 = dma.vmem_to_hbm [thread:$0]  %s261, 256, %s5, [#allocation4], 128, 128, 8
    $region37: #{tpu_custom_call.1} parent=1 // pred_fallthru
      _
    // Predicated region
    $region38: #{tpu_custom_call.1} parent=1 // pred_check
      _
    $region39: #{tpu_custom_call.1} parent=1 // pred_check_branch
      %268 = sbr.rel (0) target = $region41
    $region40: #{tpu_custom_call.1} parent=1 // pred_region
      %269 = dma.done [#allocation4], 256
    $region41: #{tpu_custom_call.1} parent=1 // pred_fallthru
      _
    %270 = vsyncpa [#allocation3], 1
    %271 = vsyncpa [#allocation6], 1
    %272 = vsyncpa [#allocation4], 1

</llo_original>
